<compile_context>
chip_gen: v7x
topology: tpu7x:2x2x1
jax: 0.10.0
libtpu: 0.0.40
codegen_flags: <defaults>
</compile_context>

<pallas_src>
import jax
import jax.numpy as jnp
from jax.experimental import pallas as pl
from jax.experimental.pallas import tpu as pltpu

BN_EPS = 1e-3               # matches nn.BatchNorm2d(eps=0.001)
ROW_TILE_TARGET = 2048      # target rows per tile (amortizes grid-step cost)
VMEM_CAP = 48 * 1024 * 1024 # stay below v7x 64 MiB physical VMEM


def _round_up(x, m):
    return ((x + m - 1) // m) * m


def _pick_row_tile(rows):
    """Row tile (multiple of 8) near ROW_TILE_TARGET with minimal padding."""
    n_tiles = -(-rows // ROW_TILE_TARGET)
    return _round_up(max(-(-rows // n_tiles), 8), 8)


def _vmem_limit(block_bytes):
    """Computed scoped-VMEM limit: double-buffered blocks + margin, capped."""
    return int(max(8 << 20, min(2 * block_bytes + (2 << 20), VMEM_CAP)))


# ----------------------------- Pallas kernels ------------------------------

def _conv_stats_kernel(p_ref, w_ref, o_ref, s_ref):
    # p_ref: (TR, K)      bf16  im2col patch rows
    # w_ref: (K, Cout)    bf16  folded 3x3 weights
    # o_ref: (TR, Cout)   bf16  conv output rows
    # s_ref: (1, 2, Cout) f32   per-tile [sum ; sum-of-squares] (f32 stats)
    acc = jnp.dot(p_ref[...], w_ref[...], preferred_element_type=jnp.float32)
    o_ref[...] = acc.astype(o_ref.dtype)
    ssum = jnp.sum(acc, axis=0, keepdims=True)
    ssq = jnp.sum(acc * acc, axis=0, keepdims=True)
    s_ref[0] = jnp.concatenate([ssum, ssq], axis=0)


def _bn_relu_kernel(x_ref, sc_ref, sh_ref, o_ref):
    # x_ref: (TB, Cout) bf16; sc/sh: (1, Cout) f32; o_ref: (TB, Cout) bf16
    x = x_ref[...].astype(jnp.float32)
    o_ref[...] = jnp.maximum(x * sc_ref[...] + sh_ref[...], 0.0).astype(o_ref.dtype)


# ------------------------------ Pallas wrappers -----------------------------

def conv3x3_with_stats(p2d, wmat, tr):
    """p2d: (R_pad, K) bf16 im2col rows; wmat: (K, Cout) bf16."""
    R_pad, K = p2d.shape
    Cout = wmat.shape[1]
    n_tiles = R_pad // tr
    block_bytes = (2 * tr * K * 2            # double-buffered patch block
                   + 2 * K * Cout * 2        # weights
                   + 2 * tr * Cout * 2       # conv output block
                   + 2 * 2 * Cout * 4)       # stats block
    conv, stats = pl.pallas_call(
        _conv_stats_kernel,
        out_shape=(jax.ShapeDtypeStruct((R_pad, Cout), jnp.bfloat16),
                   jax.ShapeDtypeStruct((n_tiles, 2, Cout), jnp.float32)),
        grid=(n_tiles,),
        in_specs=[
            pl.BlockSpec((tr, K), lambda i: (i, 0)),
            pl.BlockSpec((K, Cout), lambda i: (0, 0)),
        ],
        out_specs=(
            pl.BlockSpec((tr, Cout), lambda i: (i, 0)),
            pl.BlockSpec((1, 2, Cout), lambda i: (i, 0, 0)),
        ),
        compiler_params=pltpu.CompilerParams(
            dimension_semantics=("parallel",),
            vmem_limit_bytes=_vmem_limit(block_bytes)),
    )(p2d, wmat)
    return conv, stats


def bn_relu(conv2d, scale, shift, tb):
    """conv2d: (R_pad, Cout) bf16; scale/shift: (Cout,) f32 -> (R_pad, Cout) bf16."""
    R_pad, Cout = conv2d.shape
    n_tiles = R_pad // tb
    block_bytes = 4 * tb * Cout * 2 + 4 * Cout * 4
    return pl.pallas_call(
        _bn_relu_kernel,
        out_shape=jax.ShapeDtypeStruct((R_pad, Cout), jnp.bfloat16),
        grid=(n_tiles,),
        in_specs=[
            pl.BlockSpec((tb, Cout), lambda i: (i, 0)),
            pl.BlockSpec((1, Cout), lambda i: (0, 0)),
            pl.BlockSpec((1, Cout), lambda i: (0, 0)),
        ],
        out_specs=pl.BlockSpec((tb, Cout), lambda i: (i, 0)),
        compiler_params=pltpu.CompilerParams(
            dimension_semantics=("parallel",),
            vmem_limit_bytes=_vmem_limit(block_bytes)),
    )(conv2d, scale.reshape(1, Cout), shift.reshape(1, Cout))


# ------------------------------- JAX glue ----------------------------------

def _im2col_3x3(x_nhwc, stride):
    """3x3 / pad=1 / stride-s patches, flattened to (N*Ho*Wo, 9*Cin)."""
    N, H, W, Cin = x_nhwc.shape
    s = int(stride)
    Ho = (H - 1) // s + 1
    Wo = (W - 1) // s + 1
    xp = jnp.pad(x_nhwc, ((0, 0), (1, 1), (1, 1), (0, 0)))
    taps = []
    for ky in range(3):
        for kx in range(3):
            taps.append(jax.lax.slice(
                xp, (0, ky, kx, 0),
                (N, ky + s * (Ho - 1) + 1, kx + s * (Wo - 1) + 1, Cin),
                (1, s, s, 1)))
    patches = jnp.concatenate(taps, axis=-1)            # (N, Ho, Wo, 9*Cin)
    return patches.reshape(N * Ho * Wo, 9 * Cin), Ho, Wo


def conv_bn_relu_layer(x_nhwc, w_oihw, gamma, beta, stride, eps=BN_EPS):
    """Conv2d(3x3, pad=1, no bias) + train-mode BatchNorm2d + ReLU."""
    N, H, W, Cin = x_nhwc.shape
    Cout = w_oihw.shape[0]

    p2d, Ho, Wo = _im2col_3x3(x_nhwc, stride)
    R = N * Ho * Wo
    tr = _pick_row_tile(R)
    R_pad = _round_up(R, tr)
    if R_pad > R:
        p2d = jnp.pad(p2d, ((0, R_pad - R), (0, 0)))     # zero rows -> zero conv
    p2d = p2d.astype(jnp.bfloat16)

    # (Cout, Cin, 3, 3) -> (ky, kx, Cin, Cout) -> (9*Cin, Cout), bf16.
    wmat = jnp.transpose(w_oihw, (2, 3, 1, 0)).reshape(9 * Cin, Cout)
    wmat = wmat.astype(jnp.bfloat16)

    conv, stats = conv3x3_with_stats(p2d, wmat, tr)

    # Train-mode BN statistics over the true N*Ho*Wo rows (padded rows are
    # all-zero im2col rows -> zero conv output -> contribute nothing).
    sums = jnp.sum(stats, axis=0)                        # (2, Cout), f32
    mean = sums[0] / R
    var = sums[1] / R - mean * mean
    inv = jax.lax.rsqrt(var + eps)
    scale = (gamma * inv).astype(jnp.float32)
    shift = (beta - mean * scale).astype(jnp.float32)

    out2d = bn_relu(conv, scale, shift, tr)
    return out2d[:R].reshape(N, Ho, Wo, Cout)            # bf16 NHWC


def init_backbone_params(key, in_channel, out_channels, layer_nums):
    """Kaiming-normal (fan_out, relu) conv weights; BN gamma=1, beta=0."""
    params = []
    cin = in_channel
    for i, cout in enumerate(out_channels):
        block = []
        n_convs = 1 + layer_nums[i]
        for j in range(n_convs):
            c_in = cin if j == 0 else cout
            key, wk = jax.random.split(key)
            std = (2.0 / (cout * 9)) ** 0.5
            w = jax.random.normal(wk, (cout, c_in, 3, 3), jnp.float32) * std
            gamma = jnp.ones((cout,), jnp.float32)
            beta = jnp.zeros((cout,), jnp.float32)
            block.append((w, gamma, beta))
        params.append(block)
        cin = cout
    return params


def backbone_forward(x_nchw, params, layer_strides):
    """x: (b, c, y_l, x_l) -> list of per-block NCHW outputs."""
    x = jnp.transpose(x_nchw, (0, 2, 3, 1))              # NCHW -> NHWC
    outs = []
    for block, stride in zip(params, layer_strides):
        for j, (w, gamma, beta) in enumerate(block):
            s = stride if j == 0 else 1
            x = conv_bn_relu_layer(x, w, gamma, beta, s)
        outs.append(jnp.transpose(x, (0, 3, 1, 2)).astype(jnp.float32))
    return outs


# ------------------------------ pure-JAX reference --------------------------

def reference_forward(x_nchw, params, layer_strides, eps=BN_EPS):
    x = x_nchw
    outs = []
    for block, stride in zip(params, layer_strides):
        for j, (w, gamma, beta) in enumerate(block):
            s = stride if j == 0 else 1
            y = jax.lax.conv_general_dilated(
                x, w, window_strides=(s, s), padding=((1, 1), (1, 1)),
                dimension_numbers=('NCHW', 'OIHW', 'NCHW'))
            mean = jnp.mean(y, axis=(0, 2, 3), keepdims=True)
            var = jnp.mean((y - mean) ** 2, axis=(0, 2, 3), keepdims=True)
            y = (y - mean) * jax.lax.rsqrt(var + eps)
            y = y * gamma.reshape(1, -1, 1, 1) + beta.reshape(1, -1, 1, 1)
            x = jnp.maximum(y, 0.0)
        outs.append(x)
    return outs


if __name__ == "__main__":
    key = jax.random.PRNGKey(0)
    in_channel = 4
    out_channels = [8, 16, 32]
    layer_nums = [1, 1, 1]
    layer_strides = [2, 2, 2]

    kx, kp = jax.random.split(key)
    x = jax.random.normal(kx, (2, in_channel, 16, 16), jnp.float32)
    params = init_backbone_params(kp, in_channel, out_channels, layer_nums)

    outs = jax.block_until_ready(backbone_forward(x, params, layer_strides))

    refs = reference_forward(x, params, layer_strides)
    expected_shapes = [(2, 8, 8, 8), (2, 16, 4, 4), (2, 32, 2, 2)]
    for o, r, es in zip(outs, refs, expected_shapes):
        assert o.shape == es, (o.shape, es)
        err = float(jnp.max(jnp.abs(o - r)))
        # bf16 patches / weights / intermediates through 6 conv+BN+ReLU layers.
        assert jnp.allclose(o, r, atol=3e-2, rtol=3e-2), f"mismatch, max err {err}"

    print("KERNEL_OK")
</pallas_src>

<mosaic_0001>
module attributes {stable_mosaic.version = 11 : i64} {
  func.func @_conv_stats_kernel(%arg0: i32, %arg1: memref<128x36xbf16, #tpu.memory_space<vmem>>, %arg2: memref<36x8xbf16, #tpu.memory_space<vmem>>, %arg3: memref<128x8xbf16, #tpu.memory_space<vmem>>, %arg4: memref<1x2x8xf32, #tpu.memory_space<vmem>>) attributes {dimension_semantics = [#tpu.dimension_semantics<parallel>], iteration_bounds = array<i64: 1>, scalar_prefetch = 0 : i64, scratch_operands = 0 : i64, tpu.core_type = #tpu.core_type<tc>, window_params = [{transform_indices = @transform_0, window_bounds = array<i64: 128, 36>}, {pipeline_mode = #tpu.pipeline_mode<synchronous>, transform_indices = @transform_1, window_bounds = array<i64: 36, 8>}, {transform_indices = @transform_2, window_bounds = array<i64: 128, 8>}, {transform_indices = @transform_3, window_bounds = array<i64: 1, 2, 8>}]} {
    %c0 = arith.constant 0 : index
    %c0_0 = arith.constant 0 : index
    %0 = vector.load %arg1[%c0, %c0_0] : memref<128x36xbf16, #tpu.memory_space<vmem>>, vector<128x36xbf16>
    %c0_1 = arith.constant 0 : index
    %c0_2 = arith.constant 0 : index
    %1 = vector.load %arg2[%c0_1, %c0_2] : memref<36x8xbf16, #tpu.memory_space<vmem>>, vector<36x8xbf16>
    %cst = arith.constant dense<0.000000e+00> : vector<128x8xf32>
    %2 = tpu.matmul %0, %1, %cst {dimension_numbers = #tpu.dot_dimension_numbers<[1], [0], [0], [1], [0, 0, 1, 1], [], []>} : vector<128x36xbf16>, vector<36x8xbf16>, vector<128x8xf32> -> vector<128x8xf32>
    %3 = arith.truncf %2 : vector<128x8xf32> to vector<128x8xbf16>
    %c0_3 = arith.constant 0 : index
    %c0_4 = arith.constant 0 : index
    %4 = vector.load %arg3[%c0_3, %c0_4] : memref<128x8xbf16, #tpu.memory_space<vmem>>, vector<128x8xbf16>
    tpu.vector_store %arg3[%c0_3, %c0_4], %3 {strides = array<i32>} : memref<128x8xbf16, #tpu.memory_space<vmem>>, vector<128x8xbf16>,
    %cst_5 = arith.constant dense<0.000000e+00> : vector<8xf32>
    %5 = vector.multi_reduction <add>, %2, %cst_5 [0] : vector<128x8xf32> to vector<8xf32>
    %6 = vector.shape_cast %5 : vector<8xf32> to vector<1x8xf32>
    %7 = arith.mulf %2, %2 : vector<128x8xf32>
    %cst_6 = arith.constant dense<0.000000e+00> : vector<8xf32>
    %8 = vector.multi_reduction <add>, %7, %cst_6 [0] : vector<128x8xf32> to vector<8xf32>
    %9 = vector.shape_cast %8 : vector<8xf32> to vector<1x8xf32>
    %10 = tpu.concatenate %6, %9 in 0 : vector<1x8xf32>, vector<1x8xf32> -> vector<2x8xf32>
    %c0_7 = arith.constant 0 : index
    %c0_8 = arith.constant 0 : index
    %c0_9 = arith.constant 0 : index
    %11 = vector.load %arg4[%c0_7, %c0_8, %c0_9] : memref<1x2x8xf32, #tpu.memory_space<vmem>>, vector<1x2x8xf32>
    %12 = vector.shape_cast %11 : vector<1x2x8xf32> to vector<2x8xf32>
    %13 = vector.shape_cast %10 : vector<2x8xf32> to vector<1x2x8xf32>
    tpu.vector_store %arg4[%c0_7, %c0_8, %c0_9], %13 {strides = array<i32>} : memref<1x2x8xf32, #tpu.memory_space<vmem>>, vector<1x2x8xf32>,
    return
  }
  func.func @transform_0(%arg0: i32) -> (i32, i32) {
    %c0_i32 = arith.constant 0 : i32
    %c0_i32_0 = arith.constant 0 : i32
    return %arg0, %c0_i32 : i32, i32
  }
  func.func @transform_1(%arg0: i32) -> (i32, i32) {
    %c0_i32 = arith.constant 0 : i32
    %c0_i32_0 = arith.constant 0 : i32
    %c0_i32_1 = arith.constant 0 : i32
    return %c0_i32, %c0_i32_0 : i32, i32
  }
  func.func @transform_2(%arg0: i32) -> (i32, i32) {
    %c0_i32 = arith.constant 0 : i32
    %c0_i32_0 = arith.constant 0 : i32
    return %arg0, %c0_i32 : i32, i32
  }
  func.func @transform_3(%arg0: i32) -> (i32, i32, i32) {
    %c0_i32 = arith.constant 0 : i32
    %c0_i32_0 = arith.constant 0 : i32
    %c0_i32_1 = arith.constant 0 : i32
    return %arg0, %c0_i32, %c0_i32_0 : i32, i32, i32
  }
}

</mosaic_0001>

<llo_original>
// kernel: tpu_custom_call.1
$region0: #{tpu_custom_call.1}
  #allocation0 [shape = 'u32[]', space=smem, size = 0x4, offset = 0x4, fixed_abs, tag = 'smem constant byte address 0x4 - core index']
  #allocation1 [shape = 'u32[144,128]{1,0:T(1,128)}', space=vmem, size = 0x12000, scoped, tag = 'internal scratch']
  %s0 = inlined_call_operand.vmem [shape: bf16[128,36], index: 0, kind: input, shape index: {}]
  %s1 = inlined_call_operand.vmem [shape: bf16[36,8], index: 1, kind: input, shape index: {}]
  %s2 = inlined_call_operand.vmem [shape: bf16[128,8], index: 2, kind: output, shape index: {0}]
  %s3 = inlined_call_operand.hbm [shape: f32[1,2,8], index: 3, kind: output, shape index: {1}]
  %4 = xla_tuple %s2, %s3
  %s5 = sld [smem:[#allocation0]]
  $region26: #{tpu_custom_call.1} parent=0
    _
  %s7 = ssub.s32 1, %s5
  %s8 = scalar_select 0, %s7, %s5
  $region1: #{tpu_custom_call.1} parent=0
    #allocation2 [shape = 'u8[1024]{0}', space=vmem, size = 0x400, scoped, tag = 'output window, operand 1, single buffered']
    #allocation3 [shape = 's32[1]{0}', space=sflag, size = 0x4, scoped, tag = 'scoped memory for tpu_custom_call.1']
    %9 = vsyncpa [#allocation3], 0
    // Predicated region
    $region2: #{tpu_custom_call.1} parent=1 // pred_check
      _
    $region3: #{tpu_custom_call.1} parent=1 // pred_check_branch
      %11 = sbr.rel (0) target = $region5
    $region4: #{tpu_custom_call.1} parent=1 // pred_region
      _
    $region5: #{tpu_custom_call.1} parent=1 // pred_fallthru
      _
    // Predicated region
    $region6: #{tpu_custom_call.1} parent=1 // pred_check
      _
    $region7: #{tpu_custom_call.1} parent=1 // pred_check_branch
      %13 = sbr.rel (0) target = $region9
    $region8: #{tpu_custom_call.1} parent=1 // pred_region
      _
    $region9: #{tpu_custom_call.1} parent=1 // pred_fallthru
      _
    %v15 = vld [vmem:[%s0] sm:$0xf]
    %v16 = vld [vmem:[%s0 + $0x4] sm:$0xf]
    %v17 = vld [vmem:[%s0 + $0x8] sm:$0xf]
    %v18 = vld [vmem:[%s0 + $0xc] sm:$0xf]
    %v19 = vld [vmem:[%s0 + $0x10] sm:$0xf]
    %v20 = vld [vmem:[%s0 + $0x14] sm:$0xf]
    %v21 = vld [vmem:[%s0 + $0x18] sm:$0xf]
    %v22 = vld [vmem:[%s0 + $0x1c] sm:$0xf]
    %v23 = vld [vmem:[%s0 + $0x20] sm:$0xf]
    %v24 = vld [vmem:[%s0 + $0x24] sm:$0xf]
    %v25 = vld [vmem:[%s0 + $0x28] sm:$0xf]
    %v26 = vld [vmem:[%s0 + $0x2c] sm:$0xf]
    %v27 = vld [vmem:[%s0 + $0x30] sm:$0xf]
    %v28 = vld [vmem:[%s0 + $0x34] sm:$0xf]
    %v29 = vld [vmem:[%s0 + $0x38] sm:$0xf]
    %v30 = vld [vmem:[%s0 + $0x3c] sm:$0xf]
    %v31 = vld [vmem:[%s1] sm:$0xf]
    %v32 = vld [vmem:[%s1 + $0x4] sm:$0xf]
    %v33 = vld [vmem:[%s1 + $0x8] sm:$0xf]
    %v34 = vld [vmem:[%s1 + $0xc] sm:$0xf]
    %v35 = vld [vmem:[%s1 + $0x10] sm:$0x3]
    %v52 = vunpack.c.l.b16 %v15
    %v53 = vunpack.c.l.b16 %v16
    %v54 = vunpack.c.l.b16 %v17
    %v55 = vunpack.c.l.b16 %v18
    %v56 = vunpack.c.l.b16 %v19
    %v57 = vunpack.c.l.b16 %v20
    %v58 = vunpack.c.l.b16 %v21
    %v59 = vunpack.c.l.b16 %v22
    %v60 = vunpack.c.l.b16 %v23
    %v61 = vunpack.c.l.b16 %v24
    %v62 = vunpack.c.l.b16 %v25
    %v63 = vunpack.c.l.b16 %v26
    %v64 = vunpack.c.l.b16 %v27
    %v65 = vunpack.c.l.b16 %v28
    %v66 = vunpack.c.l.b16 %v29
    %v67 = vunpack.c.l.b16 %v30
    %v68 = vpack.c.b16 %v53, %v52
    %v69 = vpack.c.b16 %v55, %v54
    %v70 = vpack.c.b16 %v57, %v56
    %v71 = vpack.c.b16 %v59, %v58
    %v72 = vpack.c.b16 %v61, %v60
    %v73 = vpack.c.b16 %v63, %v62
    %v74 = vpack.c.b16 %v65, %v64
    %v75 = vpack.c.b16 %v67, %v66
    %v81 = vunpack.c.l.b16 %v31
    %v82 = vunpack.c.l.b16 %v32
    %v83 = vunpack.c.l.b16 %v33
    %v84 = vunpack.c.l.b16 %v34
    %v85 = vunpack.c.l.b16 %v35
    %v86 = vpack.c.b16 %v82, %v81
    %v87 = vpack.c.b16 %v84, %v83
    %v88 = vpack.c.b16 %v85, %v85
    %vm91 = vcmask 293888
    %v93 = vsel %vm91, %v68, 0
    %v96 = vsel %vm91, %v69, 0
    %v99 = vsel %vm91, %v70, 0
    %v102 = vsel %vm91, %v71, 0
    %v105 = vsel %vm91, %v72, 0
    %v108 = vsel %vm91, %v73, 0
    %v111 = vsel %vm91, %v74, 0
    %v114 = vsel %vm91, %v75, 0
    %vm116 = vcmask 1041408
    %v118 = vsel %vm116, %v88, 0
    %120 = vmatprep.subr.bf16.mxu0 0
    %121 = vmatpush1.bf16.msra.mxu0 %v86
    %122 = vmatprep.subr.bf16.mxu0 0
    %123 = vmatpush1.bf16.msra.mxu0 %v87
    %124 = vmatprep.subr.bf16.mxu0 0
    %125 = vmatpush1.bf16.msra.mxu0 %v118
    %126 = vmatprep.subr.bf16.mxu0 0
    %127 = vmatpush1.bf16.msra.mxu0 0
    %128 = vmatprep.subr.bf16.mxu0 0
    %129 = vmatpush1.bf16.msra.mxu0 0
    %130 = vmatprep.subr.bf16.mxu0 0
    %131 = vmatpush1.bf16.msra.mxu0 0
    %132 = vmatprep.subr.bf16.mxu0 0
    %133 = vmatpush1.bf16.msra.mxu0 0
    %134 = vmatprep.subr.bf16.mxu0 0
    %135 = vmatpush1.bf16.msra.mxu0 0
    %136 = vmatprep.subr.bf16.mxu0 0
    %137 = vmatpush1.bf16.msra.mxu0 0
    %138 = vmatprep.subr.bf16.mxu0 0
    %139 = vmatpush1.bf16.msra.mxu0 0
    %140 = vmatprep.subr.bf16.mxu0 0
    %141 = vmatpush1.bf16.msra.mxu0 0
    %142 = vmatprep.subr.bf16.mxu0 0
    %143 = vmatpush1.bf16.msra.mxu0 0
    %144 = vmatprep.subr.bf16.mxu0 0
    %145 = vmatpush1.bf16.msra.mxu0 0
    %146 = vmatprep.subr.bf16.mxu0 0
    %147 = vmatpush1.bf16.msra.mxu0 0
    %148 = vmatprep.subr.bf16.mxu0 0
    %149 = vmatpush1.bf16.msra.mxu0 0
    %150 = vmatprep.subr.bf16.mxu0 0
    %151 = vmatpush1.bf16.msra.mxu0 0
    %152 = vmatprep.mubr.bf16.mxu0 0
    %153 = vmatmul.mubr.bf16.gmra.mrb[0].mxu0 %v93
    %v154 = vpop.f32.mrb[0].mxu0
    %v155 = vadd.f32 0.0, %v154
    %v156 = vpop.f32.mrb[0].mxu0
    %v157 = vpop.f32.mrb[0].mxu0
    %v158 = vadd.f32 0.0, %v157
    %v159 = vpop.f32.mrb[0].mxu0
    %160 = vmatprep.mubr.bf16.mxu0 0
    %161 = vmatmul.mubr.bf16.gmra.mrb[0].mxu0 %v96
    %v162 = vpop.f32.mrb[0].mxu0
    %v163 = vadd.f32 0.0, %v162
    %v164 = vpop.f32.mrb[0].mxu0
    %v165 = vpop.f32.mrb[0].mxu0
    %v166 = vadd.f32 0.0, %v165
    %v167 = vpop.f32.mrb[0].mxu0
    %168 = vmatprep.mubr.bf16.mxu0 0
    %169 = vmatmul.mubr.bf16.gmra.mrb[0].mxu0 %v99
    %v170 = vpop.f32.mrb[0].mxu0
    %v171 = vadd.f32 0.0, %v170
    %v172 = vpop.f32.mrb[0].mxu0
    %v173 = vpop.f32.mrb[0].mxu0
    %v174 = vadd.f32 0.0, %v173
    %v175 = vpop.f32.mrb[0].mxu0
    %176 = vmatprep.mubr.bf16.mxu0 0
    %177 = vmatmul.mubr.bf16.gmra.mrb[0].mxu0 %v102
    %v178 = vpop.f32.mrb[0].mxu0
    %v179 = vadd.f32 0.0, %v178
    %v180 = vpop.f32.mrb[0].mxu0
    %v181 = vpop.f32.mrb[0].mxu0
    %v182 = vadd.f32 0.0, %v181
    %v183 = vpop.f32.mrb[0].mxu0
    %184 = vmatprep.mubr.bf16.mxu0 0
    %185 = vmatmul.mubr.bf16.gmra.mrb[0].mxu0 %v105
    %v186 = vpop.f32.mrb[0].mxu0
    %v187 = vadd.f32 0.0, %v186
    %v188 = vpop.f32.mrb[0].mxu0
    %v189 = vpop.f32.mrb[0].mxu0
    %v190 = vadd.f32 0.0, %v189
    %v191 = vpop.f32.mrb[0].mxu0
    %192 = vmatprep.mubr.bf16.mxu0 0
    %193 = vmatmul.mubr.bf16.gmra.mrb[0].mxu0 %v108
    %v194 = vpop.f32.mrb[0].mxu0
    %v195 = vadd.f32 0.0, %v194
    %v196 = vpop.f32.mrb[0].mxu0
    %v197 = vpop.f32.mrb[0].mxu0
    %v198 = vadd.f32 0.0, %v197
    %v199 = vpop.f32.mrb[0].mxu0
    %200 = vmatprep.mubr.bf16.mxu0 0
    %201 = vmatmul.mubr.bf16.gmra.mrb[0].mxu0 %v111
    %v202 = vpop.f32.mrb[0].mxu0
    %v203 = vadd.f32 0.0, %v202
    %v204 = vpop.f32.mrb[0].mxu0
    %v205 = vpop.f32.mrb[0].mxu0
    %v206 = vadd.f32 0.0, %v205
    %v207 = vpop.f32.mrb[0].mxu0
    %208 = vmatprep.mubr.bf16.mxu0 0
    %209 = vmatmul.mubr.bf16.gmra.mrb[0].mxu0 %v114
    %v210 = vpop.f32.mrb[0].mxu0
    %v211 = vadd.f32 0.0, %v210
    %v212 = vpop.f32.mrb[0].mxu0
    %v213 = vpop.f32.mrb[0].mxu0
    %v214 = vadd.f32 0.0, %v213
    %v215 = vpop.f32.mrb[0].mxu0
    %216 = vdwg.mxu0
    %v217 = vpack.c.bf16 %v158, %v155
    %v218 = vpack.c.bf16 %v166, %v163
    %v219 = vpack.c.bf16 %v174, %v171
    %v220 = vpack.c.bf16 %v182, %v179
    %v221 = vpack.c.bf16 %v190, %v187
    %v222 = vpack.c.bf16 %v198, %v195
    %v223 = vpack.c.bf16 %v206, %v203
    %v224 = vpack.c.bf16 %v214, %v211
    %v233 = vunpack.c.l.b16 %v217
    %v234 = vunpack.c.h.b16 %v217
    %v235 = vunpack.c.l.b16 %v218
    %v236 = vunpack.c.h.b16 %v218
    %v237 = vunpack.c.l.b16 %v219
    %v238 = vunpack.c.h.b16 %v219
    %v239 = vunpack.c.l.b16 %v220
    %v240 = vunpack.c.h.b16 %v220
    %v241 = vunpack.c.l.b16 %v221
    %v242 = vunpack.c.h.b16 %v221
    %v243 = vunpack.c.l.b16 %v222
    %v244 = vunpack.c.h.b16 %v222
    %v245 = vunpack.c.l.b16 %v223
    %v246 = vunpack.c.h.b16 %v223
    %v247 = vunpack.c.l.b16 %v224
    %v248 = vunpack.c.h.b16 %v224
    %v249 = vpack.c.b16 %v233, %v233
    %v250 = vpack.c.b16 %v234, %v234
    %v251 = vpack.c.b16 %v235, %v235
    %v252 = vpack.c.b16 %v236, %v236
    %v253 = vpack.c.b16 %v237, %v237
    %v254 = vpack.c.b16 %v238, %v238
    %v255 = vpack.c.b16 %v239, %v239
    %v256 = vpack.c.b16 %v240, %v240
    %v257 = vpack.c.b16 %v241, %v241
    %v258 = vpack.c.b16 %v242, %v242
    %v259 = vpack.c.b16 %v243, %v243
    %v260 = vpack.c.b16 %v244, %v244
    %v261 = vpack.c.b16 %v245, %v245
    %v262 = vpack.c.b16 %v246, %v246
    %v263 = vpack.c.b16 %v247, %v247
    %v264 = vpack.c.b16 %v248, %v248
    %vm281 = vcmask 60416
    %282 = vst.msk [vmem:[%s2] sm:$0xf] %vm281, %v249
    %283 = vst.msk [vmem:[%s2 + $0x4] sm:$0xf] %vm281, %v250
    %284 = vst.msk [vmem:[%s2 + $0x8] sm:$0xf] %vm281, %v251
    %285 = vst.msk [vmem:[%s2 + $0xc] sm:$0xf] %vm281, %v252
    %286 = vst.msk [vmem:[%s2 + $0x10] sm:$0xf] %vm281, %v253
    %287 = vst.msk [vmem:[%s2 + $0x14] sm:$0xf] %vm281, %v254
    %288 = vst.msk [vmem:[%s2 + $0x18] sm:$0xf] %vm281, %v255
    %289 = vst.msk [vmem:[%s2 + $0x1c] sm:$0xf] %vm281, %v256
    %290 = vst.msk [vmem:[%s2 + $0x20] sm:$0xf] %vm281, %v257
    %291 = vst.msk [vmem:[%s2 + $0x24] sm:$0xf] %vm281, %v258
    %292 = vst.msk [vmem:[%s2 + $0x28] sm:$0xf] %vm281, %v259
    %293 = vst.msk [vmem:[%s2 + $0x2c] sm:$0xf] %vm281, %v260
    %294 = vst.msk [vmem:[%s2 + $0x30] sm:$0xf] %vm281, %v261
    %295 = vst.msk [vmem:[%s2 + $0x34] sm:$0xf] %vm281, %v262
    %296 = vst.msk [vmem:[%s2 + $0x38] sm:$0xf] %vm281, %v263
    %297 = vst.msk [vmem:[%s2 + $0x3c] sm:$0xf] %vm281, %v264
    %vm298 = vcmask 64512
    %v299 = vsel %vm298, %v155, 0.0
    %v300 = vsel %vm298, %v158, 0.0
    %v301 = vadd.f32 %v299, %v300
    %v302 = vsel %vm298, %v163, 0.0
    %v303 = vadd.f32 %v301, %v302
    %v304 = vsel %vm298, %v166, 0.0
    %v305 = vadd.f32 %v303, %v304
    %v306 = vsel %vm298, %v171, 0.0
    %v307 = vadd.f32 %v305, %v306
    %v308 = vsel %vm298, %v174, 0.0
    %v309 = vadd.f32 %v307, %v308
    %v310 = vsel %vm298, %v179, 0.0
    %v311 = vadd.f32 %v309, %v310
    %v312 = vsel %vm298, %v182, 0.0
    %v313 = vadd.f32 %v311, %v312
    %v314 = vsel %vm298, %v187, 0.0
    %v315 = vadd.f32 %v313, %v314
    %v316 = vsel %vm298, %v190, 0.0
    %v317 = vadd.f32 %v315, %v316
    %v318 = vsel %vm298, %v195, 0.0
    %v319 = vadd.f32 %v317, %v318
    %v320 = vsel %vm298, %v198, 0.0
    %v321 = vadd.f32 %v319, %v320
    %v322 = vsel %vm298, %v203, 0.0
    %v323 = vadd.f32 %v321, %v322
    %v324 = vsel %vm298, %v206, 0.0
    %v325 = vadd.f32 %v323, %v324
    %v326 = vsel %vm298, %v211, 0.0
    %v327 = vadd.f32 %v325, %v326
    %v328 = vsel %vm298, %v214, 0.0
    %v329 = vadd.f32 %v327, %v328
    %v330 = vrot.slane %v329, 4
    %v331 = vadd.f32 %v329, %v330
    %v332 = vrot.slane %v331, 2
    %v333 = vadd.f32 %v331, %v332
    %v334 = vrot.slane %v333, 1
    %v335 = vadd.f32 %v333, %v334
    %v336 = vmul.f32 %v155, %v155
    %v337 = vmul.f32 %v158, %v158
    %v338 = vmul.f32 %v163, %v163
    %v339 = vmul.f32 %v166, %v166
    %v340 = vmul.f32 %v171, %v171
    %v341 = vmul.f32 %v174, %v174
    %v342 = vmul.f32 %v179, %v179
    %v343 = vmul.f32 %v182, %v182
    %v344 = vmul.f32 %v187, %v187
    %v345 = vmul.f32 %v190, %v190
    %v346 = vmul.f32 %v195, %v195
    %v347 = vmul.f32 %v198, %v198
    %v348 = vmul.f32 %v203, %v203
    %v349 = vmul.f32 %v206, %v206
    %v350 = vmul.f32 %v211, %v211
    %v351 = vmul.f32 %v214, %v214
    %v352 = vsel %vm298, %v336, 0.0
    %v353 = vsel %vm298, %v337, 0.0
    %v354 = vadd.f32 %v352, %v353
    %v355 = vsel %vm298, %v338, 0.0
    %v356 = vadd.f32 %v354, %v355
    %v357 = vsel %vm298, %v339, 0.0
    %v358 = vadd.f32 %v356, %v357
    %v359 = vsel %vm298, %v340, 0.0
    %v360 = vadd.f32 %v358, %v359
    %v361 = vsel %vm298, %v341, 0.0
    %v362 = vadd.f32 %v360, %v361
    %v363 = vsel %vm298, %v342, 0.0
    %v364 = vadd.f32 %v362, %v363
    %v365 = vsel %vm298, %v343, 0.0
    %v366 = vadd.f32 %v364, %v365
    %v367 = vsel %vm298, %v344, 0.0
    %v368 = vadd.f32 %v366, %v367
    %v369 = vsel %vm298, %v345, 0.0
    %v370 = vadd.f32 %v368, %v369
    %v371 = vsel %vm298, %v346, 0.0
    %v372 = vadd.f32 %v370, %v371
    %v373 = vsel %vm298, %v347, 0.0
    %v374 = vadd.f32 %v372, %v373
    %v375 = vsel %vm298, %v348, 0.0
    %v376 = vadd.f32 %v374, %v375
    %v377 = vsel %vm298, %v349, 0.0
    %v378 = vadd.f32 %v376, %v377
    %v379 = vsel %vm298, %v350, 0.0
    %v380 = vadd.f32 %v378, %v379
    %v381 = vsel %vm298, %v351, 0.0
    %v382 = vadd.f32 %v380, %v381
    %v383 = vrot.slane %v382, 4
    %v384 = vadd.f32 %v382, %v383
    %v385 = vrot.slane %v384, 2
    %v386 = vadd.f32 %v384, %v385
    %v387 = vrot.slane %v386, 1
    %v388 = vadd.f32 %v386, %v387
    %vm389 = vcmask 1040384
    %v390 = vsel %vm389, %v335, %v388
    %vm391 = vcmask 58368
    %392 = vst.msk [vmem:[#allocation2] sm:$0x3] %vm391, %v390
    // Predicated region
    $region10: #{tpu_custom_call.1} parent=1 // pred_check
      _
    $region11: #{tpu_custom_call.1} parent=1 // pred_check_branch
      %394 = sbr.rel (0) target = $region13
    $region12: #{tpu_custom_call.1} parent=1 // pred_region
      _
    $region13: #{tpu_custom_call.1} parent=1 // pred_fallthru
      _
    // Predicated region
    $region14: #{tpu_custom_call.1} parent=1 // pred_check
      _
    $region15: #{tpu_custom_call.1} parent=1 // pred_check_branch
      %396 = sbr.rel (0) target = $region17
    $region16: #{tpu_custom_call.1} parent=1 // pred_region
      %s398 = ssub.s32 32, 32
      %399 = vsyncadd [#allocation3], %s398
      %s401 = sshll.u32 [#allocation2], 4
      %s402 = int_to_ptr.vmem [resolvable:$true] %s401
      %404 = dma.vmem_to_hbm [thread:$0]  %s402, 32, %s3, [#allocation3]
    $region17: #{tpu_custom_call.1} parent=1 // pred_fallthru
      _
    // Predicated region
    $region18: #{tpu_custom_call.1} parent=1 // pred_check
      _
    $region19: #{tpu_custom_call.1} parent=1 // pred_check_branch
      %406 = sbr.rel (0) target = $region21
    $region20: #{tpu_custom_call.1} parent=1 // pred_region
      _
    $region21: #{tpu_custom_call.1} parent=1 // pred_fallthru
      _
    // Predicated region
    $region22: #{tpu_custom_call.1} parent=1 // pred_check
      _
    $region23: #{tpu_custom_call.1} parent=1 // pred_check_branch
      %408 = sbr.rel (0) target = $region25
    $region24: #{tpu_custom_call.1} parent=1 // pred_region
      %409 = dma.done [#allocation3], 32
    $region25: #{tpu_custom_call.1} parent=1 // pred_fallthru
      _
    %410 = vsyncpa [#allocation3], 1

</llo_original>
